<compile_context>
chip_gen: v6e
topology: v6e:2x2x1
jax: 0.10.0
libtpu: 0.0.40
codegen_flags: <defaults>
</compile_context>

<pallas_src>
import jax
import jax.numpy as jnp
from jax.experimental import pallas as pl
from jax.experimental.pallas import tpu as pltpu


_SMALL_HW_THRESHOLD = 128    # below this, put C on lanes instead of HW
_FAST_PATH_ROW_TILE = 256    # pixels (rows) per grid step in the C-on-lanes path


def _hhead_rows_kernel(x_ref, w_ref, b_ref, o_ref):
    # C-on-lanes fast path.
    # x_ref: (TM, C) f32 VMEM; w_ref: (C, 1) f32 VMEM (resident);
    # b_ref: (1,)   f32 SMEM;  o_ref: (TM, 1) f32 VMEM (tiny store, negligible bytes).
    y = jnp.dot(x_ref[...], w_ref[...], preferred_element_type=jnp.float32)
    o_ref[...] = (y + b_ref[0]).astype(o_ref.dtype)


def _hhead_tiles_kernel(x_ref, w_ref, b_ref, o_ref):
    # HW-on-lanes path for large spatial maps.
    # x_ref: (C, T) f32 VMEM; w_ref: (1, C) f32 VMEM (resident);
    # b_ref: (1,)  f32 SMEM;  o_ref: (1, T) f32 VMEM (lane-dense store).
    y = jnp.dot(w_ref[...], x_ref[...], preferred_element_type=jnp.float32)
    o_ref[...] = (y + b_ref[0]).astype(o_ref.dtype)


def _round_up(x, m):
    return ((x + m - 1) // m) * m


def _lane_tile_cap():
    """Generation-aware lane-tile cap for the HW-on-lanes path.

    2048 lanes = 8 MiB/block (f32), ~16 MiB double-buffered: fine inside
    v6e's/v7x's 32 MiB scoped-VMEM default, but past v5e's 16 MiB default,
    so v5e (and unknown chips) keep the safe 1024-lane cap.
    """
    cap = 1024
    try:
        kind = jax.devices()[0].device_kind.lower()
        if ("v6" in kind) or ("v7" in kind):
            cap = 2048
    except Exception:
        pass
    return cap


def hhead_forward(x_nchw, weight, bias):
    """x_nchw: (N, 1024, H, W) f32.  weight: (1, 1024, 1, 1).  bias: (1,)."""
    N, C, H, W = x_nchw.shape
    HW = H * W
    M = N * HW

    x = x_nchw.astype(jnp.float32)
    b1d = bias.reshape(1).astype(jnp.float32)

    if HW < _SMALL_HW_THRESHOLD:
        # ---------- C-on-lanes fast path (the real head has HW == 1). ----------
        if HW == 1:
            x2d = x.reshape(N, C)                               # pure reshape
        else:
            # One explicit transpose pass in the wrapper; still far cheaper than
            # the strided, lane-starved DMA of the HW-on-lanes layout at tiny HW.
            x2d = jnp.transpose(x.reshape(N, C, HW), (0, 2, 1)).reshape(M, C)
        w_col = weight.reshape(C, 1).astype(jnp.float32)

        tm = M if M <= _FAST_PATH_ROW_TILE else _FAST_PATH_ROW_TILE
        grid = (pl.cdiv(M, tm),)   # ragged tail block masked by Pallas

        out2d = pl.pallas_call(
            _hhead_rows_kernel,
            out_shape=jax.ShapeDtypeStruct((M, 1), jnp.float32),
            grid=grid,
            in_specs=[
                # Contiguous (TM, C) activation tile: C=1024 on lanes.
                pl.BlockSpec((tm, C), lambda i: (i, 0)),
                # Weight column stays resident across the whole grid.
                pl.BlockSpec((C, 1), lambda i: (0, 0)),
                # Bias as a scalar in SMEM.
                pl.BlockSpec(memory_space=pltpu.MemorySpace.SMEM),
            ],
            out_specs=pl.BlockSpec((tm, 1), lambda i: (i, 0)),
            compiler_params=pltpu.CompilerParams(
                dimension_semantics=("parallel",)),
            cost_estimate=pl.CostEstimate(
                flops=2 * M * C,
                transcendentals=0,
                bytes_accessed=4 * (M * C + M + C),
            ),
        )(x2d, w_col, b1d)
        # Row order is (n, h, w), matching torch.flatten of the (N,1,H,W) conv out.
        return out2d.reshape(M)

    # ---------- HW-on-lanes path for larger spatial maps. ----------
    x3d = x.reshape(N, C, HW)                       # reshape only, no transpose
    w_row = weight.reshape(1, C).astype(jnp.float32)

    cap = _lane_tile_cap()
    tile = cap if HW >= cap else _round_up(HW, 128)
    # Ragged HW: cdiv grid; Pallas masks the boundary block on read/write, so the
    # steady-state tile stays at the cap instead of falling back to a huge block.
    grid = (N, pl.cdiv(HW, tile))
    # TODO(synk): when HW // tile == 1 on v7x the only parallel axis is N; an odd
    # N leaves one TensorCore underutilized (could fold axes for better balance).

    out3d = pl.pallas_call(
        _hhead_tiles_kernel,
        out_shape=jax.ShapeDtypeStruct((N, 1, HW), jnp.float32),
        grid=grid,
        in_specs=[
            # One batch row, all channels, one HW tile; leading dim squeezed.
            pl.BlockSpec((None, C, tile), lambda n, j: (n, 0, j)),
            # Weight row stays resident across the whole grid.
            pl.BlockSpec((1, C), lambda n, j: (0, 0)),
            # Bias as a scalar in SMEM.
            pl.BlockSpec(memory_space=pltpu.MemorySpace.SMEM),
        ],
        out_specs=pl.BlockSpec((None, 1, tile), lambda n, j: (n, 0, j)),
        compiler_params=pltpu.CompilerParams(
            dimension_semantics=("parallel", "parallel"),
            vmem_limit_bytes=32 * 1024 * 1024),
        cost_estimate=pl.CostEstimate(
            flops=2 * N * HW * C,
            transcendentals=0,
            bytes_accessed=4 * (N * C * HW + N * HW + C),
        ),
    )(x3d, w_row, b1d)

    # torch.flatten(conv_out): (N, 1, H, W) -> (N*H*W,) in row-major order.
    return out3d.reshape(N * HW)


if __name__ == "__main__":
    key = jax.random.PRNGKey(0)
    kx, kw, kb = jax.random.split(key, 3)

    # Channels fixed at 1024 by Conv2d(1024, 1, 1); keep batch/spatial tiny.
    N, C, H, W = 2, 1024, 4, 4
    x = jax.random.normal(kx, (N, C, H, W), dtype=jnp.float32)

    # Deterministic synthetic parameters (same shapes as nn.Conv2d(1024,1,1)).
    fan_in = C * 1 * 1
    bound = 1.0 / (fan_in ** 0.5)
    weight = jax.random.uniform(kw, (1, C, 1, 1), jnp.float32, -bound, bound)
    bias = jax.random.uniform(kb, (1,), jnp.float32, -bound, bound)

    out = jax.jit(hhead_forward)(x, weight, bias)
    jax.block_until_ready(out)

    # Plain-JAX reference: 1x1 conv (channel dot) + bias, then flatten.
    ref = (jnp.einsum("nchw,c->nhw", x, weight.reshape(C)) + bias[0]).reshape(-1)
    assert out.shape == (N * H * W,)
    assert jnp.allclose(out, ref, atol=1e-4, rtol=1e-4), float(
        jnp.max(jnp.abs(out - ref)))

    # Also exercise the HW == 1 layout (the configuration the real head hits),
    # which uses the pure-reshape C-on-lanes fast path.
    x1 = jax.random.normal(kx, (4, C, 1, 1), dtype=jnp.float32)
    out1 = jax.jit(hhead_forward)(x1, weight, bias)
    jax.block_until_ready(out1)
    ref1 = (jnp.einsum("nchw,c->nhw", x1, weight.reshape(C)) + bias[0]).reshape(-1)
    assert jnp.allclose(out1, ref1, atol=1e-4, rtol=1e-4), float(
        jnp.max(jnp.abs(out1 - ref1)))

    print("KERNEL_OK")
</pallas_src>

<mosaic_0001>
module attributes {stable_mosaic.version = 11 : i64} {
  func.func @_hhead_rows_kernel(%arg0: i32, %arg1: memref<32x1024xf32, #tpu.memory_space<vmem>>, %arg2: memref<1024x1xf32, #tpu.memory_space<vmem>>, %arg3: memref<1xf32, #tpu.memory_space<smem>>, %arg4: memref<32x1xf32, #tpu.memory_space<vmem>>) attributes {dimension_semantics = [#tpu.dimension_semantics<parallel>], iteration_bounds = array<i64: 1>, scalar_prefetch = 0 : i64, scratch_operands = 0 : i64, tpu.core_type = #tpu.core_type<tc>, window_params = [{transform_indices = @transform_0, window_bounds = array<i64: 32, 1024>}, {pipeline_mode = #tpu.pipeline_mode<synchronous>, transform_indices = @transform_1, window_bounds = array<i64: 1024, 1>}, {transform_indices = @transform_2, window_bounds = array<i64: 1>}, {transform_indices = @transform_3, window_bounds = array<i64: 32, 1>}]} {
    %c0 = arith.constant 0 : index
    %c0_0 = arith.constant 0 : index
    %0 = vector.load %arg1[%c0, %c0_0] : memref<32x1024xf32, #tpu.memory_space<vmem>>, vector<32x1024xf32>
    %c0_1 = arith.constant 0 : index
    %c0_2 = arith.constant 0 : index
    %1 = vector.load %arg2[%c0_1, %c0_2] : memref<1024x1xf32, #tpu.memory_space<vmem>>, vector<1024x1xf32>
    %cst = arith.constant dense<0.000000e+00> : vector<32x1xf32>
    %2 = tpu.matmul %0, %1, %cst {dimension_numbers = #tpu.dot_dimension_numbers<[1], [0], [0], [1], [0, 0, 1, 1], [], []>} : vector<32x1024xf32>, vector<1024x1xf32>, vector<32x1xf32> -> vector<32x1xf32>
    %c0_3 = arith.constant 0 : index
    %3 = memref.load %arg3[%c0_3] : memref<1xf32, #tpu.memory_space<smem>>
    %4 = vector.broadcast %3 : f32 to vector<32x1xf32>
    %5 = arith.addf %2, %4 : vector<32x1xf32>
    %c0_4 = arith.constant 0 : index
    %c0_5 = arith.constant 0 : index
    %6 = vector.load %arg4[%c0_4, %c0_5] : memref<32x1xf32, #tpu.memory_space<vmem>>, vector<32x1xf32>
    tpu.vector_store %arg4[%c0_4, %c0_5], %5 {strides = array<i32>} : memref<32x1xf32, #tpu.memory_space<vmem>>, vector<32x1xf32>,
    return
  }
  func.func @transform_0(%arg0: i32) -> (i32, i32) {
    %c0_i32 = arith.constant 0 : i32
    %c0_i32_0 = arith.constant 0 : i32
    return %arg0, %c0_i32 : i32, i32
  }
  func.func @transform_1(%arg0: i32) -> (i32, i32) {
    %c0_i32 = arith.constant 0 : i32
    %c0_i32_0 = arith.constant 0 : i32
    %c0_i32_1 = arith.constant 0 : i32
    return %c0_i32, %c0_i32_0 : i32, i32
  }
  func.func @transform_2(%arg0: i32) -> i32 {
    %c0_i32 = arith.constant 0 : i32
    %c0_i32_0 = arith.constant 0 : i32
    return %c0_i32 : i32
  }
  func.func @transform_3(%arg0: i32) -> (i32, i32) {
    %c0_i32 = arith.constant 0 : i32
    %c0_i32_0 = arith.constant 0 : i32
    return %arg0, %c0_i32 : i32, i32
  }
}

</mosaic_0001>

<llo_original>
// kernel: hhead_forward.1
$region0: #{hhead_forward.1}
  #allocation0 [shape = 'u32[]', space=smem, size = 0x4, offset = 0x4, fixed_abs, tag = 'smem constant byte address 0x4 - core index']
  #allocation1 [shape = 'u32[144,128]{1,0:T(1,128)}', space=vmem, size = 0x12000, scoped, tag = 'internal scratch']
  #allocation2 [shape = 'f32[1]{0:T(128)S(6)}', space=smem, size = 0x200, scoped, tag = 'scoped memory for hhead_forward.1']
  %s0 = inlined_call_operand.vmem [shape: f32[32,1024], index: 0, kind: input, shape index: {}]
  %s1 = inlined_call_operand.vmem [shape: f32[1024,1], index: 1, kind: input, shape index: {}]
  %s2 = inlined_call_operand.<no memory space> [shape: f32[1], index: 2, kind: input, shape index: {}]
  %s3 = inlined_call_operand.vmem [shape: f32[32,1], index: 3, kind: output, shape index: {}]
  %s4 = sld [smem:[#allocation0]]
  $region22: #{hhead_forward.1} parent=0
    _
  %s6 = ssub.s32 1, %s4
  %s7 = scalar_select 0, %s6, %s4
  %8 = sst [smem:[#allocation2]] %s2
  // Predicated region
  $region2: #{hhead_forward.1} parent=0 // pred_check
    _
  $region3: #{hhead_forward.1} parent=0 // pred_check_branch
    %10 = sbr.rel (0) target = $region5
  $region4: #{hhead_forward.1} parent=0 // pred_region
    _
  $region5: #{hhead_forward.1} parent=0 // pred_fallthru
    _
  // Predicated region
  $region6: #{hhead_forward.1} parent=0 // pred_check
    _
  $region7: #{hhead_forward.1} parent=0 // pred_check_branch
    %12 = sbr.rel (0) target = $region9
  $region8: #{hhead_forward.1} parent=0 // pred_region
    _
  $region9: #{hhead_forward.1} parent=0 // pred_fallthru
    _
  // Predicated region
  $region10: #{hhead_forward.1} parent=0 // pred_check
    _
  $region11: #{hhead_forward.1} parent=0 // pred_check_branch
    %14 = sbr.rel (0) target = $region13
  $region12: #{hhead_forward.1} parent=0 // pred_region
    _
  $region13: #{hhead_forward.1} parent=0 // pred_fallthru
    _
  %v15 = vld [vmem:[%s0] sm:$0xff]
  %v16 = vld [vmem:[%s0 + $0x8] sm:$0xff]
  %v17 = vld [vmem:[%s0 + $0x10] sm:$0xff]
  %v18 = vld [vmem:[%s0 + $0x18] sm:$0xff]
  %v19 = vld [vmem:[%s0 + $0x20] sm:$0xff]
  %v20 = vld [vmem:[%s0 + $0x28] sm:$0xff]
  %v21 = vld [vmem:[%s0 + $0x30] sm:$0xff]
  %v22 = vld [vmem:[%s0 + $0x38] sm:$0xff]
  %v23 = vld [vmem:[%s0 + $0x40] sm:$0xff]
  %v24 = vld [vmem:[%s0 + $0x48] sm:$0xff]
  %v25 = vld [vmem:[%s0 + $0x50] sm:$0xff]
  %v26 = vld [vmem:[%s0 + $0x58] sm:$0xff]
  %v27 = vld [vmem:[%s0 + $0x60] sm:$0xff]
  %v28 = vld [vmem:[%s0 + $0x68] sm:$0xff]
  %v29 = vld [vmem:[%s0 + $0x70] sm:$0xff]
  %v30 = vld [vmem:[%s0 + $0x78] sm:$0xff]
  %v31 = vld [vmem:[%s0 + $0x80] sm:$0xff]
  %v32 = vld [vmem:[%s0 + $0x88] sm:$0xff]
  %v33 = vld [vmem:[%s0 + $0x90] sm:$0xff]
  %v34 = vld [vmem:[%s0 + $0x98] sm:$0xff]
  %v35 = vld [vmem:[%s0 + $0xa0] sm:$0xff]
  %v36 = vld [vmem:[%s0 + $0xa8] sm:$0xff]
  %v37 = vld [vmem:[%s0 + $0xb0] sm:$0xff]
  %v38 = vld [vmem:[%s0 + $0xb8] sm:$0xff]
  %v39 = vld [vmem:[%s0 + $0xc0] sm:$0xff]
  %v40 = vld [vmem:[%s0 + $0xc8] sm:$0xff]
  %v41 = vld [vmem:[%s0 + $0xd0] sm:$0xff]
  %v42 = vld [vmem:[%s0 + $0xd8] sm:$0xff]
  %v43 = vld [vmem:[%s0 + $0xe0] sm:$0xff]
  %v44 = vld [vmem:[%s0 + $0xe8] sm:$0xff]
  %v45 = vld [vmem:[%s0 + $0xf0] sm:$0xff]
  %v46 = vld [vmem:[%s0 + $0xf8] sm:$0xff]
  %v47 = vld [vmem:[%s1] sm:$0xff]
  %v48 = vld [vmem:[%s1 + $0x8] sm:$0xff]
  %v49 = vld [vmem:[%s1 + $0x10] sm:$0xff]
  %v50 = vld [vmem:[%s1 + $0x18] sm:$0xff]
  %v51 = vld [vmem:[%s1 + $0x20] sm:$0xff]
  %v52 = vld [vmem:[%s1 + $0x28] sm:$0xff]
  %v53 = vld [vmem:[%s1 + $0x30] sm:$0xff]
  %v54 = vld [vmem:[%s1 + $0x38] sm:$0xff]
  %v55 = vld [vmem:[%s1 + $0x40] sm:$0xff]
  %v56 = vld [vmem:[%s1 + $0x48] sm:$0xff]
  %v57 = vld [vmem:[%s1 + $0x50] sm:$0xff]
  %v58 = vld [vmem:[%s1 + $0x58] sm:$0xff]
  %v59 = vld [vmem:[%s1 + $0x60] sm:$0xff]
  %v60 = vld [vmem:[%s1 + $0x68] sm:$0xff]
  %v61 = vld [vmem:[%s1 + $0x70] sm:$0xff]
  %v62 = vld [vmem:[%s1 + $0x78] sm:$0xff]
  %v63 = vld [vmem:[%s1 + $0x80] sm:$0xff]
  %v64 = vld [vmem:[%s1 + $0x88] sm:$0xff]
  %v65 = vld [vmem:[%s1 + $0x90] sm:$0xff]
  %v66 = vld [vmem:[%s1 + $0x98] sm:$0xff]
  %v67 = vld [vmem:[%s1 + $0xa0] sm:$0xff]
  %v68 = vld [vmem:[%s1 + $0xa8] sm:$0xff]
  %v69 = vld [vmem:[%s1 + $0xb0] sm:$0xff]
  %v70 = vld [vmem:[%s1 + $0xb8] sm:$0xff]
  %v71 = vld [vmem:[%s1 + $0xc0] sm:$0xff]
  %v72 = vld [vmem:[%s1 + $0xc8] sm:$0xff]
  %v73 = vld [vmem:[%s1 + $0xd0] sm:$0xff]
  %v74 = vld [vmem:[%s1 + $0xd8] sm:$0xff]
  %v75 = vld [vmem:[%s1 + $0xe0] sm:$0xff]
  %v76 = vld [vmem:[%s1 + $0xe8] sm:$0xff]
  %v77 = vld [vmem:[%s1 + $0xf0] sm:$0xff]
  %v78 = vld [vmem:[%s1 + $0xf8] sm:$0xff]
  %v79 = vld [vmem:[%s1 + $0x100] sm:$0xff]
  %v80 = vld [vmem:[%s1 + $0x108] sm:$0xff]
  %v81 = vld [vmem:[%s1 + $0x110] sm:$0xff]
  %v82 = vld [vmem:[%s1 + $0x118] sm:$0xff]
  %v83 = vld [vmem:[%s1 + $0x120] sm:$0xff]
  %v84 = vld [vmem:[%s1 + $0x128] sm:$0xff]
  %v85 = vld [vmem:[%s1 + $0x130] sm:$0xff]
  %v86 = vld [vmem:[%s1 + $0x138] sm:$0xff]
  %v87 = vld [vmem:[%s1 + $0x140] sm:$0xff]
  %v88 = vld [vmem:[%s1 + $0x148] sm:$0xff]
  %v89 = vld [vmem:[%s1 + $0x150] sm:$0xff]
  %v90 = vld [vmem:[%s1 + $0x158] sm:$0xff]
  %v91 = vld [vmem:[%s1 + $0x160] sm:$0xff]
  %v92 = vld [vmem:[%s1 + $0x168] sm:$0xff]
  %v93 = vld [vmem:[%s1 + $0x170] sm:$0xff]
  %v94 = vld [vmem:[%s1 + $0x178] sm:$0xff]
  %v95 = vld [vmem:[%s1 + $0x180] sm:$0xff]
  %v96 = vld [vmem:[%s1 + $0x188] sm:$0xff]
  %v97 = vld [vmem:[%s1 + $0x190] sm:$0xff]
  %v98 = vld [vmem:[%s1 + $0x198] sm:$0xff]
  %v99 = vld [vmem:[%s1 + $0x1a0] sm:$0xff]
  %v100 = vld [vmem:[%s1 + $0x1a8] sm:$0xff]
  %v101 = vld [vmem:[%s1 + $0x1b0] sm:$0xff]
  %v102 = vld [vmem:[%s1 + $0x1b8] sm:$0xff]
  %v103 = vld [vmem:[%s1 + $0x1c0] sm:$0xff]
  %v104 = vld [vmem:[%s1 + $0x1c8] sm:$0xff]
  %v105 = vld [vmem:[%s1 + $0x1d0] sm:$0xff]
  %v106 = vld [vmem:[%s1 + $0x1d8] sm:$0xff]
  %v107 = vld [vmem:[%s1 + $0x1e0] sm:$0xff]
  %v108 = vld [vmem:[%s1 + $0x1e8] sm:$0xff]
  %v109 = vld [vmem:[%s1 + $0x1f0] sm:$0xff]
  %v110 = vld [vmem:[%s1 + $0x1f8] sm:$0xff]
  %v111 = vld [vmem:[%s1 + $0x200] sm:$0xff]
  %v112 = vld [vmem:[%s1 + $0x208] sm:$0xff]
  %v113 = vld [vmem:[%s1 + $0x210] sm:$0xff]
  %v114 = vld [vmem:[%s1 + $0x218] sm:$0xff]
  %v115 = vld [vmem:[%s1 + $0x220] sm:$0xff]
  %v116 = vld [vmem:[%s1 + $0x228] sm:$0xff]
  %v117 = vld [vmem:[%s1 + $0x230] sm:$0xff]
  %v118 = vld [vmem:[%s1 + $0x238] sm:$0xff]
  %v119 = vld [vmem:[%s1 + $0x240] sm:$0xff]
  %v120 = vld [vmem:[%s1 + $0x248] sm:$0xff]
  %v121 = vld [vmem:[%s1 + $0x250] sm:$0xff]
  %v122 = vld [vmem:[%s1 + $0x258] sm:$0xff]
  %v123 = vld [vmem:[%s1 + $0x260] sm:$0xff]
  %v124 = vld [vmem:[%s1 + $0x268] sm:$0xff]
  %v125 = vld [vmem:[%s1 + $0x270] sm:$0xff]
  %v126 = vld [vmem:[%s1 + $0x278] sm:$0xff]
  %v127 = vld [vmem:[%s1 + $0x280] sm:$0xff]
  %v128 = vld [vmem:[%s1 + $0x288] sm:$0xff]
  %v129 = vld [vmem:[%s1 + $0x290] sm:$0xff]
  %v130 = vld [vmem:[%s1 + $0x298] sm:$0xff]
  %v131 = vld [vmem:[%s1 + $0x2a0] sm:$0xff]
  %v132 = vld [vmem:[%s1 + $0x2a8] sm:$0xff]
  %v133 = vld [vmem:[%s1 + $0x2b0] sm:$0xff]
  %v134 = vld [vmem:[%s1 + $0x2b8] sm:$0xff]
  %v135 = vld [vmem:[%s1 + $0x2c0] sm:$0xff]
  %v136 = vld [vmem:[%s1 + $0x2c8] sm:$0xff]
  %v137 = vld [vmem:[%s1 + $0x2d0] sm:$0xff]
  %v138 = vld [vmem:[%s1 + $0x2d8] sm:$0xff]
  %v139 = vld [vmem:[%s1 + $0x2e0] sm:$0xff]
  %v140 = vld [vmem:[%s1 + $0x2e8] sm:$0xff]
  %v141 = vld [vmem:[%s1 + $0x2f0] sm:$0xff]
  %v142 = vld [vmem:[%s1 + $0x2f8] sm:$0xff]
  %v143 = vld [vmem:[%s1 + $0x300] sm:$0xff]
  %v144 = vld [vmem:[%s1 + $0x308] sm:$0xff]
  %v145 = vld [vmem:[%s1 + $0x310] sm:$0xff]
  %v146 = vld [vmem:[%s1 + $0x318] sm:$0xff]
  %v147 = vld [vmem:[%s1 + $0x320] sm:$0xff]
  %v148 = vld [vmem:[%s1 + $0x328] sm:$0xff]
  %v149 = vld [vmem:[%s1 + $0x330] sm:$0xff]
  %v150 = vld [vmem:[%s1 + $0x338] sm:$0xff]
  %v151 = vld [vmem:[%s1 + $0x340] sm:$0xff]
  %v152 = vld [vmem:[%s1 + $0x348] sm:$0xff]
  %v153 = vld [vmem:[%s1 + $0x350] sm:$0xff]
  %v154 = vld [vmem:[%s1 + $0x358] sm:$0xff]
  %v155 = vld [vmem:[%s1 + $0x360] sm:$0xff]
  %v156 = vld [vmem:[%s1 + $0x368] sm:$0xff]
  %v157 = vld [vmem:[%s1 + $0x370] sm:$0xff]
  %v158 = vld [vmem:[%s1 + $0x378] sm:$0xff]
  %v159 = vld [vmem:[%s1 + $0x380] sm:$0xff]
  %v160 = vld [vmem:[%s1 + $0x388] sm:$0xff]
  %v161 = vld [vmem:[%s1 + $0x390] sm:$0xff]
  %v162 = vld [vmem:[%s1 + $0x398] sm:$0xff]
  %v163 = vld [vmem:[%s1 + $0x3a0] sm:$0xff]
  %v164 = vld [vmem:[%s1 + $0x3a8] sm:$0xff]
  %v165 = vld [vmem:[%s1 + $0x3b0] sm:$0xff]
  %v166 = vld [vmem:[%s1 + $0x3b8] sm:$0xff]
  %v167 = vld [vmem:[%s1 + $0x3c0] sm:$0xff]
  %v168 = vld [vmem:[%s1 + $0x3c8] sm:$0xff]
  %v169 = vld [vmem:[%s1 + $0x3d0] sm:$0xff]
  %v170 = vld [vmem:[%s1 + $0x3d8] sm:$0xff]
  %v171 = vld [vmem:[%s1 + $0x3e0] sm:$0xff]
  %v172 = vld [vmem:[%s1 + $0x3e8] sm:$0xff]
  %v173 = vld [vmem:[%s1 + $0x3f0] sm:$0xff]
  %v174 = vld [vmem:[%s1 + $0x3f8] sm:$0xff]
  %s175 = sld [smem:[#allocation2]]
  %v176 = vstv %s175
  %177 = vmatprep.subr.mxu0 0.0
  %178 = vmatpush1.msra.mxu0 %v62
  %179 = vmatprep.subr.mxu0 0.0
  %180 = vmatpush1.msra.mxu0 %v61
  %181 = vmatprep.subr.mxu0 0.0
  %182 = vmatpush1.msra.mxu0 %v60
  %183 = vmatprep.subr.mxu0 0.0
  %184 = vmatpush1.msra.mxu0 %v59
  %185 = vmatprep.subr.mxu0 0.0
  %186 = vmatpush1.msra.mxu0 %v58
  %187 = vmatprep.subr.mxu0 0.0
  %188 = vmatpush1.msra.mxu0 %v57
  %189 = vmatprep.subr.mxu0 0.0
  %190 = vmatpush1.msra.mxu0 %v56
  %191 = vmatprep.subr.mxu0 0.0
  %192 = vmatpush1.msra.mxu0 %v55
  %193 = vmatprep.subr.mxu0 0.0
  %194 = vmatpush1.msra.mxu0 %v54
  %195 = vmatprep.subr.mxu0 0.0
  %196 = vmatpush1.msra.mxu0 %v53
  %197 = vmatprep.subr.mxu0 0.0
  %198 = vmatpush1.msra.mxu0 %v52
  %199 = vmatprep.subr.mxu0 0.0
  %200 = vmatpush1.msra.mxu0 %v51
  %201 = vmatprep.subr.mxu0 0.0
  %202 = vmatpush1.msra.mxu0 %v50
  %203 = vmatprep.subr.mxu0 0.0
  %204 = vmatpush1.msra.mxu0 %v49
  %205 = vmatprep.subr.mxu0 0.0
  %206 = vmatpush1.msra.mxu0 %v48
  %207 = vmatprep.subr.mxu0 0.0
  %208 = vmatpush1.msra.mxu0 %v47
  %209 = vmatprep.subr.mxu0 0.0
  %210 = vmatpush2.msra.mxu0 %v78
  %211 = vmatprep.subr.mxu0 0.0
  %212 = vmatpush2.msra.mxu0 %v77
  %213 = vmatprep.subr.mxu0 0.0
  %214 = vmatpush2.msra.mxu0 %v76
  %215 = vmatprep.subr.mxu0 0.0
  %216 = vmatpush2.msra.mxu0 %v75
  %217 = vmatprep.subr.mxu0 0.0
  %218 = vmatpush2.msra.mxu0 %v74
  %219 = vmatprep.subr.mxu0 0.0
  %220 = vmatpush2.msra.mxu0 %v73
  %221 = vmatprep.subr.mxu0 0.0
  %222 = vmatpush2.msra.mxu0 %v72
  %223 = vmatprep.subr.mxu0 0.0
  %224 = vmatpush2.msra.mxu0 %v71
  %225 = vmatprep.subr.mxu0 0.0
  %226 = vmatpush2.msra.mxu0 %v70
  %227 = vmatprep.subr.mxu0 0.0
  %228 = vmatpush2.msra.mxu0 %v69
  %229 = vmatprep.subr.mxu0 0.0
  %230 = vmatpush2.msra.mxu0 %v68
  %231 = vmatprep.subr.mxu0 0.0
  %232 = vmatpush2.msra.mxu0 %v67
  %233 = vmatprep.subr.mxu0 0.0
  %234 = vmatpush2.msra.mxu0 %v66
  %235 = vmatprep.subr.mxu0 0.0
  %236 = vmatpush2.msra.mxu0 %v65
  %237 = vmatprep.subr.mxu0 0.0
  %238 = vmatpush2.msra.mxu0 %v64
  %239 = vmatprep.subr.mxu0 0.0
  %240 = vmatpush2.msra.mxu0 %v63
  %241 = vmatprep.mubr.f32.mxu0 %v16
  %242 = vmatmul.mubr.f32.gmra.mxu0 %v15
  %v243 = vpop.f32.mrf.mxu0
  %v244 = vadd.f32 %v176, %v243
  %v245 = vpop.f32.mrf.mxu0
  %246 = vmatprep.mubr.f32.mxu0 %v24
  %247 = vmatmul.mubr.f32.gmra.mxu0 %v23
  %v248 = vpop.f32.mrf.mxu0
  %v249 = vadd.f32 %v176, %v248
  %v250 = vpop.f32.mrf.mxu0
  %251 = vmatprep.mubr.f32.mxu0 %v32
  %252 = vmatmul.mubr.f32.gmra.mxu0 %v31
  %v253 = vpop.f32.mrf.mxu0
  %v254 = vadd.f32 %v176, %v253
  %v255 = vpop.f32.mrf.mxu0
  %256 = vmatprep.mubr.f32.mxu0 %v40
  %257 = vmatmul.mubr.f32.gmra.mxu0 %v39
  %v258 = vpop.f32.mrf.mxu0
  %v259 = vadd.f32 %v176, %v258
  %v260 = vpop.f32.mrf.mxu0
  %261 = vdwg.mxu0
  %262 = vmatprep.subr.mxu0 0.0
  %263 = vmatpush1.msra.mxu0 %v94
  %264 = vmatprep.subr.mxu0 0.0
  %265 = vmatpush1.msra.mxu0 %v93
  %266 = vmatprep.subr.mxu0 0.0
  %267 = vmatpush1.msra.mxu0 %v92
  %268 = vmatprep.subr.mxu0 0.0
  %269 = vmatpush1.msra.mxu0 %v91
  %270 = vmatprep.subr.mxu0 0.0
  %271 = vmatpush1.msra.mxu0 %v90
  %272 = vmatprep.subr.mxu0 0.0
  %273 = vmatpush1.msra.mxu0 %v89
  %274 = vmatprep.subr.mxu0 0.0
  %275 = vmatpush1.msra.mxu0 %v88
  %276 = vmatprep.subr.mxu0 0.0
  %277 = vmatpush1.msra.mxu0 %v87
  %278 = vmatprep.subr.mxu0 0.0
  %279 = vmatpush1.msra.mxu0 %v86
  %280 = vmatprep.subr.mxu0 0.0
  %281 = vmatpush1.msra.mxu0 %v85
  %282 = vmatprep.subr.mxu0 0.0
  %283 = vmatpush1.msra.mxu0 %v84
  %284 = vmatprep.subr.mxu0 0.0
  %285 = vmatpush1.msra.mxu0 %v83
  %286 = vmatprep.subr.mxu0 0.0
  %287 = vmatpush1.msra.mxu0 %v82
  %288 = vmatprep.subr.mxu0 0.0
  %289 = vmatpush1.msra.mxu0 %v81
  %290 = vmatprep.subr.mxu0 0.0
  %291 = vmatpush1.msra.mxu0 %v80
  %292 = vmatprep.subr.mxu0 0.0
  %293 = vmatpush1.msra.mxu0 %v79
  %294 = vmatprep.subr.mxu0 0.0
  %295 = vmatpush2.msra.mxu0 %v110
  %296 = vmatprep.subr.mxu0 0.0
  %297 = vmatpush2.msra.mxu0 %v109
  %298 = vmatprep.subr.mxu0 0.0
  %299 = vmatpush2.msra.mxu0 %v108
  %300 = vmatprep.subr.mxu0 0.0
  %301 = vmatpush2.msra.mxu0 %v107
  %302 = vmatprep.subr.mxu0 0.0
  %303 = vmatpush2.msra.mxu0 %v106
  %304 = vmatprep.subr.mxu0 0.0
  %305 = vmatpush2.msra.mxu0 %v105
  %306 = vmatprep.subr.mxu0 0.0
  %307 = vmatpush2.msra.mxu0 %v104
  %308 = vmatprep.subr.mxu0 0.0
  %309 = vmatpush2.msra.mxu0 %v103
  %310 = vmatprep.subr.mxu0 0.0
  %311 = vmatpush2.msra.mxu0 %v102
  %312 = vmatprep.subr.mxu0 0.0
  %313 = vmatpush2.msra.mxu0 %v101
  %314 = vmatprep.subr.mxu0 0.0
  %315 = vmatpush2.msra.mxu0 %v100
  %316 = vmatprep.subr.mxu0 0.0
  %317 = vmatpush2.msra.mxu0 %v99
  %318 = vmatprep.subr.mxu0 0.0
  %319 = vmatpush2.msra.mxu0 %v98
  %320 = vmatprep.subr.mxu0 0.0
  %321 = vmatpush2.msra.mxu0 %v97
  %322 = vmatprep.subr.mxu0 0.0
  %323 = vmatpush2.msra.mxu0 %v96
  %324 = vmatprep.subr.mxu0 0.0
  %325 = vmatpush2.msra.mxu0 %v95
  %326 = vmatprep.mubr.f32.mxu0 %v18
  %327 = vmatmul.mubr.f32.gmra.mxu0 %v17
  %v328 = vpop.f32.mrf.mxu0
  %v329 = vadd.f32 %v244, %v328
  %v330 = vpop.f32.mrf.mxu0
  %331 = vmatprep.mubr.f32.mxu0 %v26
  %332 = vmatmul.mubr.f32.gmra.mxu0 %v25
  %v333 = vpop.f32.mrf.mxu0
  %v334 = vadd.f32 %v249, %v333
  %v335 = vpop.f32.mrf.mxu0
  %336 = vmatprep.mubr.f32.mxu0 %v34
  %337 = vmatmul.mubr.f32.gmra.mxu0 %v33
  %v338 = vpop.f32.mrf.mxu0
  %v339 = vadd.f32 %v254, %v338
  %v340 = vpop.f32.mrf.mxu0
  %341 = vmatprep.mubr.f32.mxu0 %v42
  %342 = vmatmul.mubr.f32.gmra.mxu0 %v41
  %v343 = vpop.f32.mrf.mxu0
  %v344 = vadd.f32 %v259, %v343
  %v345 = vpop.f32.mrf.mxu0
  %346 = vdwg.mxu0
  %347 = vmatprep.subr.mxu0 0.0
  %348 = vmatpush1.msra.mxu0 %v126
  %349 = vmatprep.subr.mxu0 0.0
  %350 = vmatpush1.msra.mxu0 %v125
  %351 = vmatprep.subr.mxu0 0.0
  %352 = vmatpush1.msra.mxu0 %v124
  %353 = vmatprep.subr.mxu0 0.0
  %354 = vmatpush1.msra.mxu0 %v123
  %355 = vmatprep.subr.mxu0 0.0
  %356 = vmatpush1.msra.mxu0 %v122
  %357 = vmatprep.subr.mxu0 0.0
  %358 = vmatpush1.msra.mxu0 %v121
  %359 = vmatprep.subr.mxu0 0.0
  %360 = vmatpush1.msra.mxu0 %v120
  %361 = vmatprep.subr.mxu0 0.0
  %362 = vmatpush1.msra.mxu0 %v119
  %363 = vmatprep.subr.mxu0 0.0
  %364 = vmatpush1.msra.mxu0 %v118
  %365 = vmatprep.subr.mxu0 0.0
  %366 = vmatpush1.msra.mxu0 %v117
  %367 = vmatprep.subr.mxu0 0.0
  %368 = vmatpush1.msra.mxu0 %v116
  %369 = vmatprep.subr.mxu0 0.0
  %370 = vmatpush1.msra.mxu0 %v115
  %371 = vmatprep.subr.mxu0 0.0
  %372 = vmatpush1.msra.mxu0 %v114
  %373 = vmatprep.subr.mxu0 0.0
  %374 = vmatpush1.msra.mxu0 %v113
  %375 = vmatprep.subr.mxu0 0.0
  %376 = vmatpush1.msra.mxu0 %v112
  %377 = vmatprep.subr.mxu0 0.0
  %378 = vmatpush1.msra.mxu0 %v111
  %379 = vmatprep.subr.mxu0 0.0
  %380 = vmatpush2.msra.mxu0 %v142
  %381 = vmatprep.subr.mxu0 0.0
  %382 = vmatpush2.msra.mxu0 %v141
  %383 = vmatprep.subr.mxu0 0.0
  %384 = vmatpush2.msra.mxu0 %v140
  %385 = vmatprep.subr.mxu0 0.0
  %386 = vmatpush2.msra.mxu0 %v139
  %387 = vmatprep.subr.mxu0 0.0
  %388 = vmatpush2.msra.mxu0 %v138
  %389 = vmatprep.subr.mxu0 0.0
  %390 = vmatpush2.msra.mxu0 %v137
  %391 = vmatprep.subr.mxu0 0.0
  %392 = vmatpush2.msra.mxu0 %v136
  %393 = vmatprep.subr.mxu0 0.0
  %394 = vmatpush2.msra.mxu0 %v135
  %395 = vmatprep.subr.mxu0 0.0
  %396 = vmatpush2.msra.mxu0 %v134
  %397 = vmatprep.subr.mxu0 0.0
  %398 = vmatpush2.msra.mxu0 %v133
  %399 = vmatprep.subr.mxu0 0.0
  %400 = vmatpush2.msra.mxu0 %v132
  %401 = vmatprep.subr.mxu0 0.0
  %402 = vmatpush2.msra.mxu0 %v131
  %403 = vmatprep.subr.mxu0 0.0
  %404 = vmatpush2.msra.mxu0 %v130
  %405 = vmatprep.subr.mxu0 0.0
  %406 = vmatpush2.msra.mxu0 %v129
  %407 = vmatprep.subr.mxu0 0.0
  %408 = vmatpush2.msra.mxu0 %v128
  %409 = vmatprep.subr.mxu0 0.0
  %410 = vmatpush2.msra.mxu0 %v127
  %411 = vmatprep.mubr.f32.mxu0 %v20
  %412 = vmatmul.mubr.f32.gmra.mxu0 %v19
  %v413 = vpop.f32.mrf.mxu0
  %v414 = vadd.f32 %v329, %v413
  %v415 = vpop.f32.mrf.mxu0
  %416 = vmatprep.mubr.f32.mxu0 %v28
  %417 = vmatmul.mubr.f32.gmra.mxu0 %v27
  %v418 = vpop.f32.mrf.mxu0
  %v419 = vadd.f32 %v334, %v418
  %v420 = vpop.f32.mrf.mxu0
  %421 = vmatprep.mubr.f32.mxu0 %v36
  %422 = vmatmul.mubr.f32.gmra.mxu0 %v35
  %v423 = vpop.f32.mrf.mxu0
  %v424 = vadd.f32 %v339, %v423
  %v425 = vpop.f32.mrf.mxu0
  %426 = vmatprep.mubr.f32.mxu0 %v44
  %427 = vmatmul.mubr.f32.gmra.mxu0 %v43
  %v428 = vpop.f32.mrf.mxu0
  %v429 = vadd.f32 %v344, %v428
  %v430 = vpop.f32.mrf.mxu0
  %431 = vdwg.mxu0
  %432 = vmatprep.subr.mxu0 0.0
  %433 = vmatpush1.msra.mxu0 %v158
  %434 = vmatprep.subr.mxu0 0.0
  %435 = vmatpush1.msra.mxu0 %v157
  %436 = vmatprep.subr.mxu0 0.0
  %437 = vmatpush1.msra.mxu0 %v156
  %438 = vmatprep.subr.mxu0 0.0
  %439 = vmatpush1.msra.mxu0 %v155
  %440 = vmatprep.subr.mxu0 0.0
  %441 = vmatpush1.msra.mxu0 %v154
  %442 = vmatprep.subr.mxu0 0.0
  %443 = vmatpush1.msra.mxu0 %v153
  %444 = vmatprep.subr.mxu0 0.0
  %445 = vmatpush1.msra.mxu0 %v152
  %446 = vmatprep.subr.mxu0 0.0
  %447 = vmatpush1.msra.mxu0 %v151
  %448 = vmatprep.subr.mxu0 0.0
  %449 = vmatpush1.msra.mxu0 %v150
  %450 = vmatprep.subr.mxu0 0.0
  %451 = vmatpush1.msra.mxu0 %v149
  %452 = vmatprep.subr.mxu0 0.0
  %453 = vmatpush1.msra.mxu0 %v148
  %454 = vmatprep.subr.mxu0 0.0
  %455 = vmatpush1.msra.mxu0 %v147
  %456 = vmatprep.subr.mxu0 0.0
  %457 = vmatpush1.msra.mxu0 %v146
  %458 = vmatprep.subr.mxu0 0.0
  %459 = vmatpush1.msra.mxu0 %v145
  %460 = vmatprep.subr.mxu0 0.0
  %461 = vmatpush1.msra.mxu0 %v144
  %462 = vmatprep.subr.mxu0 0.0
  %463 = vmatpush1.msra.mxu0 %v143
  %464 = vmatprep.subr.mxu0 0.0
  %465 = vmatpush2.msra.mxu0 %v174
  %466 = vmatprep.subr.mxu0 0.0
  %467 = vmatpush2.msra.mxu0 %v173
  %468 = vmatprep.subr.mxu0 0.0
  %469 = vmatpush2.msra.mxu0 %v172
  %470 = vmatprep.subr.mxu0 0.0
  %471 = vmatpush2.msra.mxu0 %v171
  %472 = vmatprep.subr.mxu0 0.0
  %473 = vmatpush2.msra.mxu0 %v170
  %474 = vmatprep.subr.mxu0 0.0
  %475 = vmatpush2.msra.mxu0 %v169
  %476 = vmatprep.subr.mxu0 0.0
  %477 = vmatpush2.msra.mxu0 %v168
  %478 = vmatprep.subr.mxu0 0.0
  %479 = vmatpush2.msra.mxu0 %v167
  %480 = vmatprep.subr.mxu0 0.0
  %481 = vmatpush2.msra.mxu0 %v166
  %482 = vmatprep.subr.mxu0 0.0
  %483 = vmatpush2.msra.mxu0 %v165
  %484 = vmatprep.subr.mxu0 0.0
  %485 = vmatpush2.msra.mxu0 %v164
  %486 = vmatprep.subr.mxu0 0.0
  %487 = vmatpush2.msra.mxu0 %v163
  %488 = vmatprep.subr.mxu0 0.0
  %489 = vmatpush2.msra.mxu0 %v162
  %490 = vmatprep.subr.mxu0 0.0
  %491 = vmatpush2.msra.mxu0 %v161
  %492 = vmatprep.subr.mxu0 0.0
  %493 = vmatpush2.msra.mxu0 %v160
  %494 = vmatprep.subr.mxu0 0.0
  %495 = vmatpush2.msra.mxu0 %v159
  %496 = vmatprep.mubr.f32.mxu0 %v22
  %497 = vmatmul.mubr.f32.gmra.mxu0 %v21
  %v498 = vpop.f32.mrf.mxu0
  %v499 = vadd.f32 %v414, %v498
  %v500 = vpop.f32.mrf.mxu0
  %501 = vmatprep.mubr.f32.mxu0 %v30
  %502 = vmatmul.mubr.f32.gmra.mxu0 %v29
  %v503 = vpop.f32.mrf.mxu0
  %v504 = vadd.f32 %v419, %v503
  %v505 = vpop.f32.mrf.mxu0
  %506 = vmatprep.mubr.f32.mxu0 %v38
  %507 = vmatmul.mubr.f32.gmra.mxu0 %v37
  %v508 = vpop.f32.mrf.mxu0
  %v509 = vadd.f32 %v424, %v508
  %v510 = vpop.f32.mrf.mxu0
  %511 = vmatprep.mubr.f32.mxu0 %v46
  %512 = vmatmul.mubr.f32.gmra.mxu0 %v45
  %v513 = vpop.f32.mrf.mxu0
  %v514 = vadd.f32 %v429, %v513
  %v515 = vpop.f32.mrf.mxu0
  %516 = vdwg.mxu0
  %vm517 = vcmask 7168
  %518 = vst.msk [vmem:[%s3] sm:$0xff] %vm517, %v499
  %519 = vst.msk [vmem:[%s3 + $0x8] sm:$0xff] %vm517, %v504
  %520 = vst.msk [vmem:[%s3 + $0x10] sm:$0xff] %vm517, %v509
  %521 = vst.msk [vmem:[%s3 + $0x18] sm:$0xff] %vm517, %v514
  // Predicated region
  $region14: #{hhead_forward.1} parent=0 // pred_check
    _
  $region15: #{hhead_forward.1} parent=0 // pred_check_branch
    %523 = sbr.rel (0) target = $region17
  $region16: #{hhead_forward.1} parent=0 // pred_region
    _
  $region17: #{hhead_forward.1} parent=0 // pred_fallthru
    _
  // Predicated region
  $region18: #{hhead_forward.1} parent=0 // pred_check
    _
  $region19: #{hhead_forward.1} parent=0 // pred_check_branch
    %525 = sbr.rel (0) target = $region21
  $region20: #{hhead_forward.1} parent=0 // pred_region
    _
  $region21: #{hhead_forward.1} parent=0 // pred_fallthru
    _

</llo_original>
